<compile_context>
chip_gen: v6e
topology: v6e:2x2x1
jax: 0.10.0
libtpu: 0.0.40
codegen_flags: <defaults>
</compile_context>

<pallas_src>
import jax
import jax.numpy as jnp
from jax.experimental import pallas as pl
from jax.experimental.pallas import tpu as pltpu


def _linear_add_relu_kernel(x_ref, w_ref, b_ref, other_ref, o_ref):
    # x:     (M, K)  f32   = (1, 128)
    # w:     (N, K)  bf16  = (256, 128)   (PyTorch layout, NOT pre-transposed)
    # b:     (1, N)  f32   = (1, 256)
    # other: (M, N)  f32   = (1, 256)
    # o:     (M, N)  f32   = (1, 256)
    x_bf16 = x_ref[...].astype(jnp.bfloat16)          # cheap VPU cast, tiny tile
    # Contract last dim of x with last dim of w  ==  x @ w.T, done on the MXU
    # without materializing a transposed weight copy.
    acc = jax.lax.dot_general(
        x_bf16,
        w_ref[...],
        dimension_numbers=(((1,), (1,)), ((), ())),
        preferred_element_type=jnp.float32,
    )
    y = acc + b_ref[...] + other_ref[...]
    o_ref[...] = jnp.maximum(y, 0.0).astype(o_ref.dtype)


def linear_add_relu(x, w_bf16, b, other):
    """x: (M,128) f32, w_bf16: (256,128) bf16 (PyTorch layout), b: (256,) f32,
    other: (M,256) f32.  Returns relu(x @ w.T + b + other) as (M,256) f32."""
    M, K = x.shape
    N = w_bf16.shape[0]
    b2 = b.reshape(1, N)  # broadcasts over rows in-kernel

    bytes_accessed = (
        x.size * x.dtype.itemsize
        + w_bf16.size * w_bf16.dtype.itemsize
        + b2.size * b2.dtype.itemsize
        + other.size * other.dtype.itemsize
        + M * N * 4  # output
    )

    vmem = pltpu.MemorySpace.VMEM
    return pl.pallas_call(
        _linear_add_relu_kernel,
        out_shape=jax.ShapeDtypeStruct((M, N), jnp.float32),
        in_specs=[
            pl.BlockSpec(memory_space=vmem),  # x      (whole array)
            pl.BlockSpec(memory_space=vmem),  # weight (whole array)
            pl.BlockSpec(memory_space=vmem),  # bias   (whole array)
            pl.BlockSpec(memory_space=vmem),  # other  (whole array)
        ],
        out_specs=pl.BlockSpec(memory_space=vmem),
        cost_estimate=pl.CostEstimate(
            flops=2 * M * K * N,
            transcendentals=0,
            bytes_accessed=bytes_accessed,
        ),
    )(x, w_bf16, b2, other)
    # TODO(synk): if M ever grows, tile M with a "parallel" grid axis (v7x: 2 TCs)
    # while keeping the full weight block resident; at M=1 a gridless call is optimal.


if __name__ == "__main__":
    key = jax.random.PRNGKey(0)
    k_x, k_o, k_w, k_b = jax.random.split(key, 4)

    M, K, N = 1, 128, 256

    # Inputs (matching torch.randn(1,128) / torch.randn(1,256))
    x = jax.random.normal(k_x, (M, K), dtype=jnp.float32)
    other = jax.random.normal(k_o, (M, N), dtype=jnp.float32)

    # Deterministic "nn.Linear(128, 256)" parameters: W is (out, in) = (256, 128)
    bound = 1.0 / jnp.sqrt(K)
    w = jax.random.uniform(k_w, (N, K), dtype=jnp.float32, minval=-bound, maxval=bound)
    b = jax.random.uniform(k_b, (N,), dtype=jnp.float32, minval=-bound, maxval=bound)

    # Cast the weight to bf16 once at parameter-load time (halves the dominant DMA).
    w_bf16 = w.astype(jnp.bfloat16)

    out = linear_add_relu(x, w_bf16, b, other)
    jax.block_until_ready(out)

    # Reference check in plain JAX (f32); bf16 weight/activation introduces
    # ~1e-2-scale relative error, which is acceptable for this ReLU MLP.
    ref = jnp.maximum(x @ w.T + b + other, 0.0)
    assert out.shape == (M, N)
    assert jnp.allclose(out, ref, atol=2e-2, rtol=2e-2), (
        float(jnp.max(jnp.abs(out - ref)))
    )

    print("KERNEL_OK")
</pallas_src>

<mosaic_0001>
module attributes {stable_mosaic.version = 11 : i64} {
  func.func @_linear_add_relu_kernel(%arg0: memref<1x128xf32, #tpu.memory_space<vmem>>, %arg1: memref<256x128xbf16, #tpu.memory_space<vmem>>, %arg2: memref<1x256xf32, #tpu.memory_space<vmem>>, %arg3: memref<1x256xf32, #tpu.memory_space<vmem>>, %arg4: memref<1x256xf32, #tpu.memory_space<vmem>>) attributes {dimension_semantics = [], scalar_prefetch = 0 : i64, scratch_operands = 0 : i64, tpu.core_type = #tpu.core_type<tc>} {
    %c0 = arith.constant 0 : index
    %c0_0 = arith.constant 0 : index
    %0 = vector.load %arg0[%c0, %c0_0] : memref<1x128xf32, #tpu.memory_space<vmem>>, vector<1x128xf32>
    %1 = arith.truncf %0 : vector<1x128xf32> to vector<1x128xbf16>
    %c0_1 = arith.constant 0 : index
    %c0_2 = arith.constant 0 : index
    %2 = vector.load %arg1[%c0_1, %c0_2] : memref<256x128xbf16, #tpu.memory_space<vmem>>, vector<256x128xbf16>
    %cst = arith.constant dense<0.000000e+00> : vector<1x256xf32>
    %3 = tpu.matmul %1, %2, %cst {dimension_numbers = #tpu.dot_dimension_numbers<[1], [1], [0], [0], [0, 0, 1, 0], [], []>} : vector<1x128xbf16>, vector<256x128xbf16>, vector<1x256xf32> -> vector<1x256xf32>
    %c0_3 = arith.constant 0 : index
    %c0_4 = arith.constant 0 : index
    %4 = vector.load %arg2[%c0_3, %c0_4] : memref<1x256xf32, #tpu.memory_space<vmem>>, vector<1x256xf32>
    %5 = arith.addf %3, %4 : vector<1x256xf32>
    %c0_5 = arith.constant 0 : index
    %c0_6 = arith.constant 0 : index
    %6 = vector.load %arg3[%c0_5, %c0_6] : memref<1x256xf32, #tpu.memory_space<vmem>>, vector<1x256xf32>
    %7 = arith.addf %5, %6 : vector<1x256xf32>
    %cst_7 = arith.constant 0.000000e+00 : f32
    %8 = vector.broadcast %cst_7 : f32 to vector<1x256xf32>
    %9 = arith.maximumf %7, %8 : vector<1x256xf32>
    %c0_8 = arith.constant 0 : index
    %c0_9 = arith.constant 0 : index
    %10 = vector.load %arg4[%c0_8, %c0_9] : memref<1x256xf32, #tpu.memory_space<vmem>>, vector<1x256xf32>
    tpu.vector_store %arg4[%c0_8, %c0_9], %9 {strides = array<i32>} : memref<1x256xf32, #tpu.memory_space<vmem>>, vector<1x256xf32>,
    return
  }
}

</mosaic_0001>

<llo_original>
// kernel: tpu_custom_call.1
$region0: #{tpu_custom_call.1}
  #allocation0 [shape = 'u32[]', space=smem, size = 0x4, offset = 0x4, fixed_abs, tag = 'smem constant byte address 0x4 - core index']
  #allocation1 [shape = 'u32[144,128]{1,0:T(1,128)}', space=vmem, size = 0x12000, scoped, tag = 'internal scratch']
  %s0 = inlined_call_operand.hbm [shape: f32[1,128], index: 0, kind: input, shape index: {}]
  %s1 = inlined_call_operand.hbm [shape: bf16[256,128], index: 1, kind: input, shape index: {}]
  %s2 = inlined_call_operand.vmem [shape: f32[1,256], index: 2, kind: input, shape index: {}]
  %s3 = inlined_call_operand.vmem [shape: f32[1,256], index: 3, kind: input, shape index: {}]
  %s4 = inlined_call_operand.hbm [shape: f32[1,256], index: 4, kind: output, shape index: {}]
  %s5 = sld [smem:[#allocation0]]
  $region34: #{tpu_custom_call.1} parent=0
    _
  %s7 = ssub.s32 1, %s5
  %s8 = scalar_select 0, %s7, %s5
  $region1: #{tpu_custom_call.1} parent=0
    #allocation2 [shape = 'u8[512]{0}', space=vmem, size = 0x400, scoped, tag = 'input window, operand 0, single buffered']
    #allocation3 [shape = 's32[1]{0}', space=sflag, size = 0x4, scoped, tag = 'scoped memory for tpu_custom_call.1']
    #allocation4 [shape = 's32[1]{0}', space=sflag, size = 0x4, scoped, tag = 'scoped memory for tpu_custom_call.1']
    #allocation5 [shape = 'u8[65536]{0}', space=vmem, size = 0x10000, scoped, tag = 'input window, operand 1, single buffered']
    #allocation6 [shape = 's32[1]{0}', space=sflag, size = 0x4, scoped, tag = 'scoped memory for tpu_custom_call.1']
    #allocation7 [shape = 'u8[1024]{0}', space=vmem, size = 0x400, scoped, tag = 'output window, operand 0, single buffered']
    %9 = vsyncpa [#allocation3], 0
    %10 = vsyncpa [#allocation6], 0
    %11 = vsyncpa [#allocation4], 0
    // Predicated region
    $region2: #{tpu_custom_call.1} parent=1 // pred_check
      _
    $region3: #{tpu_custom_call.1} parent=1 // pred_check_branch
      %13 = sbr.rel (0) target = $region5
    $region4: #{tpu_custom_call.1} parent=1 // pred_region
      %s15 = ssub.s32 16, 16
      %16 = vsyncadd [#allocation3], %s15
      %s18 = sshll.u32 [#allocation2], 4
      %s19 = int_to_ptr.vmem [resolvable:$true] %s18
      %21 = dma.hbm_to_vmem [thread:$0]  %s0, 16, %s19, [#allocation3]
    $region5: #{tpu_custom_call.1} parent=1 // pred_fallthru
      _
    // Predicated region
    $region6: #{tpu_custom_call.1} parent=1 // pred_check
      _
    $region7: #{tpu_custom_call.1} parent=1 // pred_check_branch
      %23 = sbr.rel (0) target = $region9
    $region8: #{tpu_custom_call.1} parent=1 // pred_region
      %s25 = ssub.s32 2048, 2048
      %26 = vsyncadd [#allocation6], %s25
      %s27 = sshll.u32 [#allocation5], 4
      %s28 = int_to_ptr.vmem [resolvable:$true] %s27
      %33 = dma.hbm_to_vmem [thread:$0]  %s1, 2048, %s28, [#allocation6], 64, 64, 4
    $region9: #{tpu_custom_call.1} parent=1 // pred_fallthru
      _
    // Predicated region
    $region10: #{tpu_custom_call.1} parent=1 // pred_check
      _
    $region11: #{tpu_custom_call.1} parent=1 // pred_check_branch
      %35 = sbr.rel (0) target = $region13
    $region12: #{tpu_custom_call.1} parent=1 // pred_region
      _
    $region13: #{tpu_custom_call.1} parent=1 // pred_fallthru
      _
    // Predicated region
    $region14: #{tpu_custom_call.1} parent=1 // pred_check
      _
    $region15: #{tpu_custom_call.1} parent=1 // pred_check_branch
      %37 = sbr.rel (0) target = $region17
    $region16: #{tpu_custom_call.1} parent=1 // pred_region
      _
    $region17: #{tpu_custom_call.1} parent=1 // pred_fallthru
      _
    // Predicated region
    $region18: #{tpu_custom_call.1} parent=1 // pred_check
      _
    $region19: #{tpu_custom_call.1} parent=1 // pred_check_branch
      %39 = sbr.rel (0) target = $region21
    $region20: #{tpu_custom_call.1} parent=1 // pred_region
      %40 = dma.done [#allocation3], 16
    $region21: #{tpu_custom_call.1} parent=1 // pred_fallthru
      _
    // Predicated region
    $region22: #{tpu_custom_call.1} parent=1 // pred_check
      _
    $region23: #{tpu_custom_call.1} parent=1 // pred_check_branch
      %42 = sbr.rel (0) target = $region25
    $region24: #{tpu_custom_call.1} parent=1 // pred_region
      %43 = dma.done [#allocation6], 2048
    $region25: #{tpu_custom_call.1} parent=1 // pred_fallthru
      _
    %v45 = vld [vmem:[#allocation2] sm:$0x1]
    %v46 = vpack.c.bf16 %v45, %v45
    %v47 = vld [vmem:[#allocation5] sm:$0xf]
    %v48 = vld [vmem:[#allocation5 + $0x4] sm:$0xf]
    %v49 = vld [vmem:[#allocation5 + $0x8] sm:$0xf]
    %v50 = vld [vmem:[#allocation5 + $0xc] sm:$0xf]
    %v51 = vld [vmem:[#allocation5 + $0x10] sm:$0xf]
    %v52 = vld [vmem:[#allocation5 + $0x14] sm:$0xf]
    %v53 = vld [vmem:[#allocation5 + $0x18] sm:$0xf]
    %v54 = vld [vmem:[#allocation5 + $0x1c] sm:$0xf]
    %v55 = vld [vmem:[#allocation5 + $0x20] sm:$0xf]
    %v56 = vld [vmem:[#allocation5 + $0x24] sm:$0xf]
    %v57 = vld [vmem:[#allocation5 + $0x28] sm:$0xf]
    %v58 = vld [vmem:[#allocation5 + $0x2c] sm:$0xf]
    %v59 = vld [vmem:[#allocation5 + $0x30] sm:$0xf]
    %v60 = vld [vmem:[#allocation5 + $0x34] sm:$0xf]
    %v61 = vld [vmem:[#allocation5 + $0x38] sm:$0xf]
    %v62 = vld [vmem:[#allocation5 + $0x3c] sm:$0xf]
    %v63 = vld [vmem:[#allocation5 + $0x40] sm:$0xf]
    %v64 = vld [vmem:[#allocation5 + $0x44] sm:$0xf]
    %v65 = vld [vmem:[#allocation5 + $0x48] sm:$0xf]
    %v66 = vld [vmem:[#allocation5 + $0x4c] sm:$0xf]
    %v67 = vld [vmem:[#allocation5 + $0x50] sm:$0xf]
    %v68 = vld [vmem:[#allocation5 + $0x54] sm:$0xf]
    %v69 = vld [vmem:[#allocation5 + $0x58] sm:$0xf]
    %v70 = vld [vmem:[#allocation5 + $0x5c] sm:$0xf]
    %v71 = vld [vmem:[#allocation5 + $0x60] sm:$0xf]
    %v72 = vld [vmem:[#allocation5 + $0x64] sm:$0xf]
    %v73 = vld [vmem:[#allocation5 + $0x68] sm:$0xf]
    %v74 = vld [vmem:[#allocation5 + $0x6c] sm:$0xf]
    %v75 = vld [vmem:[#allocation5 + $0x70] sm:$0xf]
    %v76 = vld [vmem:[#allocation5 + $0x74] sm:$0xf]
    %v77 = vld [vmem:[#allocation5 + $0x78] sm:$0xf]
    %v78 = vld [vmem:[#allocation5 + $0x7c] sm:$0xf]
    %v79 = vld [vmem:[%s2] sm:$0x3]
    %v112 = vunpack.c.l.b16 %v47
    %v113 = vunpack.c.l.b16 %v48
    %v114 = vunpack.c.l.b16 %v49
    %v115 = vunpack.c.l.b16 %v50
    %v116 = vunpack.c.l.b16 %v51
    %v117 = vunpack.c.l.b16 %v52
    %v118 = vunpack.c.l.b16 %v53
    %v119 = vunpack.c.l.b16 %v54
    %v120 = vunpack.c.l.b16 %v55
    %v121 = vunpack.c.l.b16 %v56
    %v122 = vunpack.c.l.b16 %v57
    %v123 = vunpack.c.l.b16 %v58
    %v124 = vunpack.c.l.b16 %v59
    %v125 = vunpack.c.l.b16 %v60
    %v126 = vunpack.c.l.b16 %v61
    %v127 = vunpack.c.l.b16 %v62
    %v128 = vunpack.c.l.b16 %v63
    %v129 = vunpack.c.l.b16 %v64
    %v130 = vunpack.c.l.b16 %v65
    %v131 = vunpack.c.l.b16 %v66
    %v132 = vunpack.c.l.b16 %v67
    %v133 = vunpack.c.l.b16 %v68
    %v134 = vunpack.c.l.b16 %v69
    %v135 = vunpack.c.l.b16 %v70
    %v136 = vunpack.c.l.b16 %v71
    %v137 = vunpack.c.l.b16 %v72
    %v138 = vunpack.c.l.b16 %v73
    %v139 = vunpack.c.l.b16 %v74
    %v140 = vunpack.c.l.b16 %v75
    %v141 = vunpack.c.l.b16 %v76
    %v142 = vunpack.c.l.b16 %v77
    %v143 = vunpack.c.l.b16 %v78
    %v144 = vpack.c.b16 %v113, %v112
    %v145 = vpack.c.b16 %v115, %v114
    %v146 = vpack.c.b16 %v117, %v116
    %v147 = vpack.c.b16 %v119, %v118
    %v148 = vpack.c.b16 %v121, %v120
    %v149 = vpack.c.b16 %v123, %v122
    %v150 = vpack.c.b16 %v125, %v124
    %v151 = vpack.c.b16 %v127, %v126
    %v152 = vpack.c.b16 %v129, %v128
    %v153 = vpack.c.b16 %v131, %v130
    %v154 = vpack.c.b16 %v133, %v132
    %v155 = vpack.c.b16 %v135, %v134
    %v156 = vpack.c.b16 %v137, %v136
    %v157 = vpack.c.b16 %v139, %v138
    %v158 = vpack.c.b16 %v141, %v140
    %v159 = vpack.c.b16 %v143, %v142
    %v177 = vlaneseq
    %v178 = vshrl.u32 %v177, 7
    %v179 = vsub.s32 0, %v178
    %v180 = vrot.slane %v79, %v179
    %v181 = vlaneseq
    %v182 = vshrl.u32 %v181, 7
    %v183 = vsub.s32 1, %v182
    %v184 = vrot.slane %v79, %v183
    %187 = vmatprep.subr.bf16.mxu0 0
    %188 = vmatpush1.bf16.xpose.msra.mxu0 %v151
    %189 = vmatprep.subr.bf16.mxu0 0
    %190 = vmatpush1.bf16.xpose.msra.mxu0 %v150
    %191 = vmatprep.subr.bf16.mxu0 0
    %192 = vmatpush1.bf16.xpose.msra.mxu0 %v149
    %193 = vmatprep.subr.bf16.mxu0 0
    %194 = vmatpush1.bf16.xpose.msra.mxu0 %v148
    %195 = vmatprep.subr.bf16.mxu0 0
    %196 = vmatpush1.bf16.xpose.msra.mxu0 %v147
    %197 = vmatprep.subr.bf16.mxu0 0
    %198 = vmatpush1.bf16.xpose.msra.mxu0 %v146
    %199 = vmatprep.subr.bf16.mxu0 0
    %200 = vmatpush1.bf16.xpose.msra.mxu0 %v145
    %201 = vmatprep.subr.bf16.mxu0 0
    %202 = vmatpush1.bf16.xpose.msra.mxu0 %v144
    %203 = vmatprep.subr.bf16.mxu0 0
    %204 = vmatpush2.bf16.xpose.msra.mxu0 %v159
    %205 = vmatprep.subr.bf16.mxu0 0
    %206 = vmatpush2.bf16.xpose.msra.mxu0 %v158
    %207 = vmatprep.subr.bf16.mxu0 0
    %208 = vmatpush2.bf16.xpose.msra.mxu0 %v157
    %209 = vmatprep.subr.bf16.mxu0 0
    %210 = vmatpush2.bf16.xpose.msra.mxu0 %v156
    %211 = vmatprep.subr.bf16.mxu0 0
    %212 = vmatpush2.bf16.xpose.msra.mxu0 %v155
    %213 = vmatprep.subr.bf16.mxu0 0
    %214 = vmatpush2.bf16.xpose.msra.mxu0 %v154
    %215 = vmatprep.subr.bf16.mxu0 0
    %216 = vmatpush2.bf16.xpose.msra.mxu0 %v153
    %217 = vmatprep.subr.bf16.mxu0 0
    %218 = vmatpush2.bf16.xpose.msra.mxu0 %v152
    %219 = vmatprep.mubr.bf16.mxu0 0
    %220 = vmatmul.mubr.bf16.gmra.mxu0 %v46
    %v221 = vpop.f32.mrf.mxu0
    %v222 = vadd.f32 %v180, %v221
    %v223 = vpop.f32.mrf.mxu0
    %v224 = vadd.f32 %v184, %v223
    %v225 = vpop.f32.mrf.mxu0
    %v226 = vpop.f32.mrf.mxu0
    %227 = vdwg.mxu0
    %v228 = vld [vmem:[%s3] sm:$0x3]
    %v230 = vlaneseq
    %v231 = vshrl.u32 %v230, 7
    %v232 = vsub.s32 0, %v231
    %v233 = vrot.slane %v228, %v232
    %v234 = vlaneseq
    %v235 = vshrl.u32 %v234, 7
    %v236 = vsub.s32 1, %v235
    %v237 = vrot.slane %v228, %v236
    %v240 = vadd.f32 %v222, %v233
    %v241 = vadd.f32 %v224, %v237
    %v242 = vmax.f32 %v240, 0.0
    %v243 = vmax.f32 %v241, 0.0
    %v246 = vcombine.low %v242, %v243
    %v248 = vunpack.c.l.s4 1966171168
    %v249 = vunpack.c.0.s8 %v248
    %v250 = vlaneseq
    %v251 = vshrl.u32 %v250, 7
    %v252 = vsub.s32 %v249, %v251
    %v253 = vrot.slane %v246, %v252
    %v255 = vunpack.c.l.s4 1966171168
    %v256 = vunpack.c.0.s8 %v255
    %v257 = vlaneseq
    %v258 = vshrl.u32 %v257, 7
    %v259 = vsub.s32 %v256, %v258
    %v260 = vrot.slane %v253, %v259
    %v262 = vlaneseq
    %vm263 = vcmp.ge.s32.totalorder %v262, 0
    %vm264 = vcmp.lt.s32.totalorder %v262, 256
    %vm265 = vmand %vm263, %vm264
    %266 = vst.msk [vmem:[#allocation7] sm:$0x3] %vm265, %v260
    // Predicated region
    $region26: #{tpu_custom_call.1} parent=1 // pred_check
      _
    $region27: #{tpu_custom_call.1} parent=1 // pred_check_branch
      %268 = sbr.rel (0) target = $region29
    $region28: #{tpu_custom_call.1} parent=1 // pred_region
      %s270 = ssub.s32 32, 32
      %271 = vsyncadd [#allocation4], %s270
      %s273 = sshll.u32 [#allocation7], 4
      %s274 = int_to_ptr.vmem [resolvable:$true] %s273
      %276 = dma.vmem_to_hbm [thread:$0]  %s274, 32, %s4, [#allocation4]
    $region29: #{tpu_custom_call.1} parent=1 // pred_fallthru
      _
    // Predicated region
    $region30: #{tpu_custom_call.1} parent=1 // pred_check
      _
    $region31: #{tpu_custom_call.1} parent=1 // pred_check_branch
      %278 = sbr.rel (0) target = $region33
    $region32: #{tpu_custom_call.1} parent=1 // pred_region
      %279 = dma.done [#allocation4], 32
    $region33: #{tpu_custom_call.1} parent=1 // pred_fallthru
      _
    %280 = vsyncpa [#allocation3], 1
    %281 = vsyncpa [#allocation6], 1
    %282 = vsyncpa [#allocation4], 1

</llo_original>
